<compile_context>
chip_gen: v6e
topology: v6e:2x2x1
jax: 0.10.0
libtpu: 0.0.40
codegen_flags: <defaults>
</compile_context>

<pallas_src>
import functools

import jax
import jax.numpy as jnp
from jax import lax
from jax.experimental import pallas as pl
from jax.experimental.pallas import tpu as pltpu


def _round_up(x, m):
    return (x + m - 1) // m * m


def _vmem_capacity_bytes():
    """Physical VMEM of the current chip; conservative (v7x) fallback."""
    try:
        info = pltpu.get_tpu_info()
        cap = getattr(info, "vmem_capacity_bytes", None)
        if cap:
            return int(cap)
    except Exception:
        pass
    return 64 * 1024 * 1024


def _vq_kernel(x_ref, e2h_ref, embT_ref, emb_ref, q_ref, idx_ref, sse_ref,
               *, block_rows, n_valid):
    # x_ref   : (bn, D)     tile of flattened inputs (native dtype -> MXU)
    # e2h_ref : (1, Kp)     0.5*|e|^2, f32 (padded rows = 1e30, never win)
    # embT_ref: (D, Kp)     pre-transposed codebook, cast to input dtype
    # emb_ref : (Kp, D)     codebook (original dtype) for the one-hot gather
    # q_ref   : (bn, D)     quantized output tile
    # idx_ref : (bn, 1)     argmin indices (int32)
    # sse_ref : (bn, 1)     per-row squared error, padded rows masked to 0
    x = x_ref[...]                                                # (bn, D)
    xf = x.astype(jnp.float32)
    x2 = jnp.sum(xf * xf, axis=1, keepdims=True)                  # (bn, 1)

    # Cross term on the MXU (operands share the input dtype), f32 accumulate.
    dots = lax.dot_general(x, embT_ref[...], (((1,), (0,)), ((), ())),
                           preferred_element_type=jnp.float32)    # (bn, Kp)
    # score is a per-row monotone affine transform of the true distance:
    #   dist = |x|^2 + 2*score, so argmin(score) == argmin(dist).
    score = e2h_ref[...] - dots                                   # (bn, Kp) f32

    idx = jnp.argmin(score, axis=1).astype(jnp.int32)             # (bn,)
    min_score = jnp.min(score, axis=1, keepdims=True)             # (bn, 1)

    # One-hot gather of codebook rows via the MXU: compare against a single
    # lane-iota row (no full-tile iota materialization per step).
    kp = score.shape[1]
    lane_iota = lax.broadcasted_iota(jnp.int32, (1, kp), 1)       # (1, Kp)
    onehot = (lane_iota == idx[:, None]).astype(emb_ref.dtype)    # (bn, Kp)
    q = jnp.dot(onehot, emb_ref[...],
                preferred_element_type=jnp.float32)               # (bn, D)

    q_ref[...] = q.astype(q_ref.dtype)
    idx_ref[...] = idx[:, None]

    # |x - e|^2 = |x|^2 + 2*min(score); clamp fp cancellation at 0 and zero
    # out rows beyond the true N (n_valid is a static Python int).
    sse = jnp.maximum(x2 + 2.0 * min_score, 0.0)                  # (bn, 1)
    row = (pl.program_id(0) * block_rows
           + lax.broadcasted_iota(jnp.int32, (block_rows, 1), 0))
    sse_ref[...] = jnp.where(row < n_valid, sse, 0.0)


@functools.partial(jax.jit, static_argnames=("commitment_cost", "block_n"))
def vector_quantizer_forward(inputs, embeddings, commitment_cost=0.25,
                             block_n=1024):
    K, D = embeddings.shape
    flat = inputs.reshape(-1, D)
    N = flat.shape[0]

    k_pad = _round_up(K, 128)
    in_isz = jnp.dtype(inputs.dtype).itemsize
    emb_isz = jnp.dtype(embeddings.dtype).itemsize

    # --- per-generation VMEM budget -> row tile size ------------------------
    vmem_cap = _vmem_capacity_bytes()                 # 64 MiB on v7x, 128 MiB on v5e/v6e
    vmem_budget = vmem_cap * 3 // 4                   # headroom for compiler scratch
    # resident (non-row-tiled) buffers: emb_T, emb, e2h (x2: double-buffered)
    resident = 2 * (k_pad * D * (in_isz + emb_isz) + k_pad * 4)
    # per row: x + q double-buffered, idx/sse columns, ~4x (bn,k_pad) f32
    # intermediates (dots / score / onehot + slack)
    per_row = 4 * D * in_isz + 16 + 16 * k_pad
    bn_vmem = max(8, (vmem_budget - resident) // per_row)

    bn = min(block_n, bn_vmem, _round_up(N, 8))
    bn = max(8, (bn // 8) * 8)
    # Give the v7x megacore at least two grid steps when there is enough work.
    if _round_up(N, bn) <= bn and N >= 16:
        bn = max(8, _round_up(-(-N // 2), 8))
    n_pad = _round_up(N, bn)
    num_tiles = n_pad // bn

    if n_pad != N:
        flat = jnp.pad(flat, ((0, n_pad - N), (0, 0)))

    # --- codebook preprocessing hoisted out of the per-step body ------------
    emb_p = embeddings if k_pad == K else jnp.pad(embeddings,
                                                  ((0, k_pad - K), (0, 0)))
    emb_t = emb_p.T.astype(inputs.dtype)              # (D, Kp) for the MXU
    e2h = 0.5 * jnp.sum(emb_p.astype(jnp.float32) ** 2, axis=1)
    if k_pad != K:
        # Padded codebook rows get a huge score so they can never win argmin
        # (f32 only — do not move the score math to bf16).
        e2h = jnp.where(jnp.arange(k_pad) < K, e2h, jnp.float32(1e30))
    e2h = e2h.reshape(1, k_pad)

    kernel = functools.partial(_vq_kernel, block_rows=bn, n_valid=N)

    # NOTE: for D < 128 the (bn, D) in/out tiles are lane-underutilized; that
    # is accepted here (the kernel is VPU/XLU-bound on the (bn, Kp) work).
    q_flat, idx_col, sse_col = pl.pallas_call(
        kernel,
        out_shape=(
            jax.ShapeDtypeStruct((n_pad, D), inputs.dtype),
            jax.ShapeDtypeStruct((n_pad, 1), jnp.int32),
            jax.ShapeDtypeStruct((n_pad, 1), jnp.float32),
        ),
        grid_spec=pltpu.PrefetchScalarGridSpec(
            num_scalar_prefetch=0,
            grid=(num_tiles,),
            in_specs=[
                pl.BlockSpec((bn, D), lambda i: (i, 0)),       # input row tile
                pl.BlockSpec((1, k_pad), lambda i: (0, 0)),    # 0.5*|e|^2 (resident)
                pl.BlockSpec((D, k_pad), lambda i: (0, 0)),    # codebook^T (resident)
                pl.BlockSpec((k_pad, D), lambda i: (0, 0)),    # codebook (resident)
            ],
            out_specs=[
                pl.BlockSpec((bn, D), lambda i: (i, 0)),
                pl.BlockSpec((bn, 1), lambda i: (i, 0)),
                pl.BlockSpec((bn, 1), lambda i: (i, 0)),
            ],
        ),
        compiler_params=pltpu.CompilerParams(
            dimension_semantics=("parallel",),    # shard grid across TCs on v7x
            vmem_limit_bytes=int(vmem_budget),
        ),
    )(flat, e2h, emb_t, emb_p)

    # loss: forward value of q_latent_loss + beta * e_latent_loss == (1+beta)*mse
    mse = jnp.sum(sse_col) / jnp.float32(N * D)
    loss = (1.0 + commitment_cost) * mse
    quantized = (q_flat if n_pad == N else q_flat[:N]).reshape(inputs.shape)
    indices = idx_col[:N, 0]                          # int32 (torch returns int64)
    return quantized, loss, indices


def _reference(inputs, embeddings, commitment_cost=0.25):
    D = embeddings.shape[1]
    flat = inputs.reshape(-1, D)
    dist = (jnp.sum(flat ** 2, axis=1, keepdims=True)
            + jnp.sum(embeddings ** 2, axis=1)
            - 2.0 * flat @ embeddings.T)
    idx = jnp.argmin(dist, axis=1)
    q = embeddings[idx].reshape(inputs.shape)
    mse = jnp.mean((q - inputs) ** 2)
    loss = (1.0 + commitment_cost) * mse
    return q, loss, idx


if __name__ == "__main__":
    num_embeddings = 64
    embedding_dim = 32
    commitment_cost = 0.25

    key = jax.random.PRNGKey(0)
    k_emb, k_in = jax.random.split(key)
    # nn.Parameter(torch.rand(K, D) - 0.5)  ->  uniform(-0.5, 0.5)
    embeddings = jax.random.uniform(
        k_emb, (num_embeddings, embedding_dim),
        minval=-0.5, maxval=0.5, dtype=jnp.float32)

    # inputs: (B, H, W, C) channels-last, C == embedding_dim
    inputs = jax.random.normal(k_in, (2, 8, 16, embedding_dim),
                               dtype=jnp.float32)

    quantized, loss, indices = vector_quantizer_forward(
        inputs, embeddings, commitment_cost=commitment_cost)
    jax.block_until_ready((quantized, loss, indices))

    # lightweight correctness check against a pure-JAX reference
    q_ref, loss_ref, idx_ref = _reference(inputs, embeddings, commitment_cost)
    assert indices.shape == (inputs.size // embedding_dim,)
    assert jnp.all(indices == idx_ref.astype(jnp.int32))
    assert jnp.allclose(quantized, q_ref, atol=1e-4, rtol=1e-4)
    assert jnp.allclose(loss, loss_ref, atol=1e-5, rtol=1e-4)

    print("KERNEL_OK")
</pallas_src>

<mosaic_0001>
module attributes {stable_mosaic.version = 11 : i64} {
  func.func @_vq_kernel(%arg0: i32, %arg1: memref<128x32xf32, #tpu.memory_space<vmem>>, %arg2: memref<1x128xf32, #tpu.memory_space<vmem>>, %arg3: memref<32x128xf32, #tpu.memory_space<vmem>>, %arg4: memref<128x32xf32, #tpu.memory_space<vmem>>, %arg5: memref<128x32xf32, #tpu.memory_space<vmem>>, %arg6: memref<128x1xi32, #tpu.memory_space<vmem>>, %arg7: memref<128x1xf32, #tpu.memory_space<vmem>>) attributes {dimension_semantics = [#tpu.dimension_semantics<parallel>], iteration_bounds = array<i64: 2>, scalar_prefetch = 0 : i64, scratch_operands = 0 : i64, tpu.core_type = #tpu.core_type<tc>, window_params = [{transform_indices = @transform_0, window_bounds = array<i64: 128, 32>}, {pipeline_mode = #tpu.pipeline_mode<synchronous>, transform_indices = @transform_1, window_bounds = array<i64: 1, 128>}, {pipeline_mode = #tpu.pipeline_mode<synchronous>, transform_indices = @transform_2, window_bounds = array<i64: 32, 128>}, {pipeline_mode = #tpu.pipeline_mode<synchronous>, transform_indices = @transform_3, window_bounds = array<i64: 128, 32>}, {transform_indices = @transform_4, window_bounds = array<i64: 128, 32>}, {transform_indices = @transform_5, window_bounds = array<i64: 128, 1>}, {transform_indices = @transform_6, window_bounds = array<i64: 128, 1>}]} {
    %c0 = arith.constant 0 : index
    %c0_0 = arith.constant 0 : index
    %0 = vector.load %arg1[%c0, %c0_0] : memref<128x32xf32, #tpu.memory_space<vmem>>, vector<128x32xf32>
    %1 = arith.mulf %0, %0 : vector<128x32xf32>
    %cst = arith.constant dense<0.000000e+00> : vector<128xf32>
    %2 = vector.multi_reduction <add>, %1, %cst [1] : vector<128x32xf32> to vector<128xf32>
    %3 = vector.shape_cast %2 : vector<128xf32> to vector<128x1xf32>
    %c0_1 = arith.constant 0 : index
    %c0_2 = arith.constant 0 : index
    %4 = vector.load %arg3[%c0_1, %c0_2] : memref<32x128xf32, #tpu.memory_space<vmem>>, vector<32x128xf32>
    %cst_3 = arith.constant dense<0.000000e+00> : vector<128x128xf32>
    %5 = tpu.matmul %0, %4, %cst_3 {dimension_numbers = #tpu.dot_dimension_numbers<[1], [0], [0], [1], [0, 0, 1, 1], [], []>} : vector<128x32xf32>, vector<32x128xf32>, vector<128x128xf32> -> vector<128x128xf32>
    %c0_4 = arith.constant 0 : index
    %c0_5 = arith.constant 0 : index
    %6 = vector.load %arg2[%c0_4, %c0_5] : memref<1x128xf32, #tpu.memory_space<vmem>>, vector<1x128xf32>
    %7 = vector.broadcast %6 : vector<1x128xf32> to vector<128x128xf32>
    %8 = arith.subf %7, %5 : vector<128x128xf32>
    %9 = tpu.reduce_index %8 {axis = 1 : i32, kind = #tpu.reduction_kind<arg_min>} : vector<128x128xf32> -> vector<128xi32>
    %cst_6 = arith.constant dense<0x7F800000> : vector<128xf32>
    %10 = vector.multi_reduction <minimumf>, %8, %cst_6 [1] : vector<128x128xf32> to vector<128xf32>
    %11 = vector.shape_cast %10 : vector<128xf32> to vector<128x1xf32>
    %12 = tpu.iota {dimensions = array<i32: 1>} : vector<1x128xi32>
    %13 = vector.shape_cast %9 : vector<128xi32> to vector<128x1xi32>
    %14 = vector.broadcast %12 : vector<1x128xi32> to vector<128x128xi32>
    %15 = vector.broadcast %13 : vector<128x1xi32> to vector<128x128xi32>
    %16 = arith.cmpi eq, %14, %15 : vector<128x128xi32>
    %17 = arith.extui %16 : vector<128x128xi1> to vector<128x128xi32>
    %18 = arith.sitofp %17 : vector<128x128xi32> to vector<128x128xf32>
    %c0_7 = arith.constant 0 : index
    %c0_8 = arith.constant 0 : index
    %19 = vector.load %arg4[%c0_7, %c0_8] : memref<128x32xf32, #tpu.memory_space<vmem>>, vector<128x32xf32>
    %cst_9 = arith.constant dense<0.000000e+00> : vector<128x32xf32>
    %20 = tpu.matmul %18, %19, %cst_9 {dimension_numbers = #tpu.dot_dimension_numbers<[1], [0], [0], [1], [0, 0, 1, 1], [], []>} : vector<128x128xf32>, vector<128x32xf32>, vector<128x32xf32> -> vector<128x32xf32>
    %c0_10 = arith.constant 0 : index
    %c0_11 = arith.constant 0 : index
    %21 = vector.load %arg5[%c0_10, %c0_11] : memref<128x32xf32, #tpu.memory_space<vmem>>, vector<128x32xf32>
    tpu.vector_store %arg5[%c0_10, %c0_11], %20 {strides = array<i32>} : memref<128x32xf32, #tpu.memory_space<vmem>>, vector<128x32xf32>,
    %22 = vector.shape_cast %9 : vector<128xi32> to vector<128x1xi32>
    %c0_12 = arith.constant 0 : index
    %c0_13 = arith.constant 0 : index
    %23 = vector.load %arg6[%c0_12, %c0_13] : memref<128x1xi32, #tpu.memory_space<vmem>>, vector<128x1xi32>
    tpu.vector_store %arg6[%c0_12, %c0_13], %22 {strides = array<i32>} : memref<128x1xi32, #tpu.memory_space<vmem>>, vector<128x1xi32>,
    %cst_14 = arith.constant 2.000000e+00 : f32
    %24 = vector.broadcast %cst_14 : f32 to vector<128x1xf32>
    %25 = arith.mulf %24, %11 : vector<128x1xf32>
    %26 = arith.addf %3, %25 : vector<128x1xf32>
    %cst_15 = arith.constant 0.000000e+00 : f32
    %27 = vector.broadcast %cst_15 : f32 to vector<128x1xf32>
    %28 = arith.maximumf %26, %27 : vector<128x1xf32>
    %c128_i32 = arith.constant 128 : i32
    %29 = arith.muli %arg0, %c128_i32 : i32
    %30 = tpu.iota {dimensions = array<i32: 0>} : vector<128x1xi32>
    %31 = vector.broadcast %29 : i32 to vector<128x1xi32>
    %32 = arith.addi %31, %30 : vector<128x1xi32>
    %c256_i32 = arith.constant 256 : i32
    %33 = vector.broadcast %c256_i32 : i32 to vector<128x1xi32>
    %34 = arith.cmpi slt, %32, %33 : vector<128x1xi32>
    %cst_16 = arith.constant 0.000000e+00 : f32
    %35 = vector.broadcast %cst_16 : f32 to vector<128x1xf32>
    %36 = arith.select %34, %28, %35 : vector<128x1xi1>, vector<128x1xf32>
    %c0_17 = arith.constant 0 : index
    %c0_18 = arith.constant 0 : index
    %37 = vector.load %arg7[%c0_17, %c0_18] : memref<128x1xf32, #tpu.memory_space<vmem>>, vector<128x1xf32>
    tpu.vector_store %arg7[%c0_17, %c0_18], %36 {strides = array<i32>} : memref<128x1xf32, #tpu.memory_space<vmem>>, vector<128x1xf32>,
    return
  }
  func.func @transform_0(%arg0: i32) -> (i32, i32) {
    %c0_i32 = arith.constant 0 : i32
    %c0_i32_0 = arith.constant 0 : i32
    return %arg0, %c0_i32 : i32, i32
  }
  func.func @transform_1(%arg0: i32) -> (i32, i32) {
    %c0_i32 = arith.constant 0 : i32
    %c0_i32_0 = arith.constant 0 : i32
    %c0_i32_1 = arith.constant 0 : i32
    return %c0_i32, %c0_i32_0 : i32, i32
  }
  func.func @transform_2(%arg0: i32) -> (i32, i32) {
    %c0_i32 = arith.constant 0 : i32
    %c0_i32_0 = arith.constant 0 : i32
    %c0_i32_1 = arith.constant 0 : i32
    return %c0_i32, %c0_i32_0 : i32, i32
  }
  func.func @transform_3(%arg0: i32) -> (i32, i32) {
    %c0_i32 = arith.constant 0 : i32
    %c0_i32_0 = arith.constant 0 : i32
    %c0_i32_1 = arith.constant 0 : i32
    return %c0_i32, %c0_i32_0 : i32, i32
  }
  func.func @transform_4(%arg0: i32) -> (i32, i32) {
    %c0_i32 = arith.constant 0 : i32
    %c0_i32_0 = arith.constant 0 : i32
    return %arg0, %c0_i32 : i32, i32
  }
  func.func @transform_5(%arg0: i32) -> (i32, i32) {
    %c0_i32 = arith.constant 0 : i32
    %c0_i32_0 = arith.constant 0 : i32
    return %arg0, %c0_i32 : i32, i32
  }
  func.func @transform_6(%arg0: i32) -> (i32, i32) {
    %c0_i32 = arith.constant 0 : i32
    %c0_i32_0 = arith.constant 0 : i32
    return %arg0, %c0_i32 : i32, i32
  }
}

</mosaic_0001>

<llo_original>
// kernel: vector_quantizer_forward.1
$region0: #{vector_quantizer_forward.1}
  #allocation0 [shape = 'u32[]', space=smem, size = 0x4, offset = 0x4, fixed_abs, tag = 'smem constant byte address 0x4 - core index']
  #allocation1 [shape = 'u32[144,128]{1,0:T(1,128)}', space=vmem, size = 0x12000, scoped, tag = 'internal scratch']
  %s0 = inlined_call_operand.vmem [shape: f32[256,32], index: 0, kind: input, shape index: {}]
  %s1 = inlined_call_operand.vmem [shape: f32[1,128], index: 1, kind: input, shape index: {}]
  %s2 = inlined_call_operand.vmem [shape: f32[32,128], index: 2, kind: input, shape index: {}]
  %s3 = inlined_call_operand.vmem [shape: f32[128,32], index: 3, kind: input, shape index: {}]
  %s4 = inlined_call_operand.hbm [shape: f32[256,32], index: 4, kind: output, shape index: {0}]
  %s5 = inlined_call_operand.vmem [shape: s32[256,1], index: 5, kind: output, shape index: {1}]
  %s6 = inlined_call_operand.vmem [shape: f32[256,1], index: 6, kind: output, shape index: {2}]
  %7 = xla_tuple %s4, %s5, %s6
  %s8 = sld [smem:[#allocation0]]
  $region65: #{vector_quantizer_forward.1} parent=0
    _
  %s10 = ssub.s32 1, %s8
  %s11 = scalar_select 0, %s10, %s8
  $region1: #{vector_quantizer_forward.1} parent=0
    #allocation2 [shape = 'u8[131072]{0}', space=vmem, size = 0x20000, scoped, tag = 'output window, operand 0']
    #allocation3 [shape = 's32[2]{0}', space=sflag, size = 0x8, scoped, tag = 'scoped memory for vector_quantizer_forward.1']
    %12 = vsyncpa [#allocation3], 0
    %s13 = scalar_lea.sflag [#allocation3], 1
    %14 = vsyncpa %s13, 0
    loop: start=0, step=1, limit=4
    $region2: #{vector_quantizer_forward.1} parent=1 // loop_pre_header
      _
    $region3: #{vector_quantizer_forward.1} parent=1 // loop_header
      %s16 = sphi 0, %s20
      %p17 = scmp.ge.s32.totalorder %s16, 4
      %s26 = sphi 0, %s28
      %s29 = sphi 0, %s26
      %s30 = sphi 0, %s29
      %s46 = sphi 0, %s30
      %s50 = sphi 0, %s50
      %s52 = sphi 0, %s50
      %s53 = sphi 0, %s52
      %s67 = sphi 0, %s53
      %s71 = sphi 0, %s71
      %s73 = sphi 0, %s71
      %s74 = sphi 0, %s73
      %s88 = sphi 0, %s74
      %s92 = sphi 0, %s92
      %s94 = sphi 0, %s92
      %s95 = sphi 0, %s94
      %s109 = sphi 0, %s95
      %s115 = sphi 0, %s117
      %s118 = sphi 0, %s115
      %s119 = sphi 0, %s118
      %s135 = sphi 0, %s119
      %s141 = sphi 0, %s143
      %s144 = sphi 0, %s141
      %s145 = sphi 0, %s144
      %s161 = sphi 0, %s145
      %s167 = sphi 0, %s169
      %s170 = sphi 0, %s167
      %s171 = sphi 0, %s170
      %s187 = sphi 0, %s171
    $region4: #{vector_quantizer_forward.1} parent=1 // loop_header_branch
      %19 = sbr.rel (%p17) target = $region8
    $region5: #{vector_quantizer_forward.1} parent=1 // loop_body
      %s21 = ssub.s32 %s16, 1
      %s22 = ssub.s32 %s16, 2
      %s23 = sadd.s32 %s16, 1
      %s24 = ssub.s32 %s16, %s23
      %p25 = scmp.eq.s32.totalorder %s24, 0
      %s27 = sadd.s32 %s26, 1
      %s28 = scalar_select %p25, %s26, %s27
      %p31 = pneg %p25
      %p32 = scmp.eq.s32.totalorder %s16, 1
      %p33 = por %p31, %p32
      %p34 = scmp.ne.s32.totalorder %s26, %s29
      %p35 = scmp.eq.s32.totalorder %s16, 0
      %p36 = por %p34, %p35
      %p37 = scmp.ne.s32.totalorder %s26, %s29
      %p38 = scmp.eq.s32.totalorder %s21, 1
      %p39 = por %p37, %p38
      %p40 = scmp.ne.s32.totalorder %s29, %s30
      %p41 = scmp.eq.s32.totalorder %s21, 0
      %p42 = por %p40, %p41
      %p43 = scmp.ne.s32.totalorder %s29, %s30
      %p44 = scmp.eq.s32.totalorder %s22, 1
      %p45 = por %p43, %p44
      %p47 = scmp.ne.s32.totalorder %s30, %s46
      %p48 = scmp.eq.s32.totalorder %s22, 0
      %p49 = por %p47, %p48
      %s51 = sadd.s32 %s50, 1
      %p54 = scmp.eq.s32.totalorder %s16, 1
      %p55 = scmp.ne.s32.totalorder %s50, %s52
      %p56 = scmp.eq.s32.totalorder %s16, 0
      %p57 = por %p55, %p56
      %p58 = scmp.ne.s32.totalorder %s50, %s52
      %p59 = scmp.eq.s32.totalorder %s21, 1
      %p60 = por %p58, %p59
      %p61 = scmp.ne.s32.totalorder %s52, %s53
      %p62 = scmp.eq.s32.totalorder %s21, 0
      %p63 = por %p61, %p62
      %p64 = scmp.ne.s32.totalorder %s52, %s53
      %p65 = scmp.eq.s32.totalorder %s22, 1
      %p66 = por %p64, %p65
      %p68 = scmp.ne.s32.totalorder %s53, %s67
      %p69 = scmp.eq.s32.totalorder %s22, 0
      %p70 = por %p68, %p69
      %s72 = sadd.s32 %s71, 1
      %p75 = scmp.eq.s32.totalorder %s16, 1
      %p76 = scmp.ne.s32.totalorder %s71, %s73
      %p77 = scmp.eq.s32.totalorder %s16, 0
      %p78 = por %p76, %p77
      %p79 = scmp.ne.s32.totalorder %s71, %s73
      %p80 = scmp.eq.s32.totalorder %s21, 1
      %p81 = por %p79, %p80
      %p82 = scmp.ne.s32.totalorder %s73, %s74
      %p83 = scmp.eq.s32.totalorder %s21, 0
      %p84 = por %p82, %p83
      %p85 = scmp.ne.s32.totalorder %s73, %s74
      %p86 = scmp.eq.s32.totalorder %s22, 1
      %p87 = por %p85, %p86
      %p89 = scmp.ne.s32.totalorder %s74, %s88
      %p90 = scmp.eq.s32.totalorder %s22, 0
      %p91 = por %p89, %p90
      %s93 = sadd.s32 %s92, 1
      %p96 = scmp.eq.s32.totalorder %s16, 1
      %p97 = scmp.ne.s32.totalorder %s92, %s94
      %p98 = scmp.eq.s32.totalorder %s16, 0
      %p99 = por %p97, %p98
      %p100 = scmp.ne.s32.totalorder %s92, %s94
      %p101 = scmp.eq.s32.totalorder %s21, 1
      %p102 = por %p100, %p101
      %p103 = scmp.ne.s32.totalorder %s94, %s95
      %p104 = scmp.eq.s32.totalorder %s21, 0
      %p105 = por %p103, %p104
      %p106 = scmp.ne.s32.totalorder %s94, %s95
      %p107 = scmp.eq.s32.totalorder %s22, 1
      %p108 = por %p106, %p107
      %p110 = scmp.ne.s32.totalorder %s95, %s109
      %p111 = scmp.eq.s32.totalorder %s22, 0
      %p112 = por %p110, %p111
      %s113 = ssub.s32 %s16, %s23
      %p114 = scmp.eq.s32.totalorder %s113, 0
      %s116 = sadd.s32 %s115, 1
      %s117 = scalar_select %p114, %s115, %s116
      %p120 = pneg %p114
      %p121 = scmp.eq.s32.totalorder %s16, 1
      %p122 = por %p120, %p121
      %p123 = scmp.ne.s32.totalorder %s115, %s118
      %p124 = scmp.eq.s32.totalorder %s16, 0
      %p125 = por %p123, %p124
      %p126 = scmp.ne.s32.totalorder %s115, %s118
      %p127 = scmp.eq.s32.totalorder %s21, 1
      %p128 = por %p126, %p127
      %p129 = scmp.ne.s32.totalorder %s118, %s119
      %p130 = scmp.eq.s32.totalorder %s21, 0
      %p131 = por %p129, %p130
      %p132 = scmp.ne.s32.totalorder %s118, %s119
      %p133 = scmp.eq.s32.totalorder %s22, 1
      %p134 = por %p132, %p133
      %p136 = scmp.ne.s32.totalorder %s119, %s135
      %p137 = scmp.eq.s32.totalorder %s22, 0
      %p138 = por %p136, %p137
      %s139 = ssub.s32 %s16, %s23
      %p140 = scmp.eq.s32.totalorder %s139, 0
      %s142 = sadd.s32 %s141, 1
      %s143 = scalar_select %p140, %s141, %s142
      %p146 = pneg %p140
      %p147 = scmp.eq.s32.totalorder %s16, 1
      %p148 = por %p146, %p147
      %p149 = scmp.ne.s32.totalorder %s141, %s144
      %p150 = scmp.eq.s32.totalorder %s16, 0
      %p151 = por %p149, %p150
      %p152 = scmp.ne.s32.totalorder %s141, %s144
      %p153 = scmp.eq.s32.totalorder %s21, 1
      %p154 = por %p152, %p153
      %p155 = scmp.ne.s32.totalorder %s144, %s145
      %p156 = scmp.eq.s32.totalorder %s21, 0
      %p157 = por %p155, %p156
      %p158 = scmp.ne.s32.totalorder %s144, %s145
      %p159 = scmp.eq.s32.totalorder %s22, 1
      %p160 = por %p158, %p159
      %p162 = scmp.ne.s32.totalorder %s145, %s161
      %p163 = scmp.eq.s32.totalorder %s22, 0
      %p164 = por %p162, %p163
      %s165 = ssub.s32 %s16, %s23
      %p166 = scmp.eq.s32.totalorder %s165, 0
      %s168 = sadd.s32 %s167, 1
      %s169 = scalar_select %p166, %s167, %s168
      %p172 = pneg %p166
      %p173 = scmp.eq.s32.totalorder %s16, 1
      %p174 = por %p172, %p173
      %p175 = scmp.ne.s32.totalorder %s167, %s170
      %p176 = scmp.eq.s32.totalorder %s16, 0
      %p177 = por %p175, %p176
      %p178 = scmp.ne.s32.totalorder %s167, %s170
      %p179 = scmp.eq.s32.totalorder %s21, 1
      %p180 = por %p178, %p179
      %p181 = scmp.ne.s32.totalorder %s170, %s171
      %p182 = scmp.eq.s32.totalorder %s21, 0
      %p183 = por %p181, %p182
      %p184 = scmp.ne.s32.totalorder %s170, %s171
      %p185 = scmp.eq.s32.totalorder %s22, 1
      %p186 = por %p184, %p185
      %p188 = scmp.ne.s32.totalorder %s171, %s187
      %p189 = scmp.eq.s32.totalorder %s22, 0
      %p190 = por %p188, %p189
      %p191 = scmp.le.s32.totalorder 1, %s16
      %p192 = scmp.lt.s32.totalorder %s16, 3
      %p193 = pnand %p191, %p192
      %p194 = pneg %p193
      // Predicated region
      $region9: #{vector_quantizer_forward.1} parent=5 // pred_check
        _
      $region10: #{vector_quantizer_forward.1} parent=5 // pred_check_branch
        %196 = sbr.rel (%p193) target = $region12
      $region11: #{vector_quantizer_forward.1} parent=5 // pred_region
        %s197 = ssub.s32 %s16, 1
        // Predicated region
        $region13: #{vector_quantizer_forward.1} parent=11 // pred_check
          %p198 = pneg %p63
        $region14: #{vector_quantizer_forward.1} parent=11 // pred_check_branch
          %200 = sbr.rel (%p198) target = $region16
        $region15: #{vector_quantizer_forward.1} parent=11 // pred_region
          _
        $region16: #{vector_quantizer_forward.1} parent=11 // pred_fallthru
          _
        // Predicated region
        $region17: #{vector_quantizer_forward.1} parent=11 // pred_check
          %p201 = pneg %p84
        $region18: #{vector_quantizer_forward.1} parent=11 // pred_check_branch
          %203 = sbr.rel (%p201) target = $region20
        $region19: #{vector_quantizer_forward.1} parent=11 // pred_region
          _
        $region20: #{vector_quantizer_forward.1} parent=11 // pred_fallthru
          _
        // Predicated region
        $region21: #{vector_quantizer_forward.1} parent=11 // pred_check
          %p204 = pneg %p105
        $region22: #{vector_quantizer_forward.1} parent=11 // pred_check_branch
          %206 = sbr.rel (%p204) target = $region24
        $region23: #{vector_quantizer_forward.1} parent=11 // pred_region
          _
        $region24: #{vector_quantizer_forward.1} parent=11 // pred_fallthru
          _
      $region12: #{vector_quantizer_forward.1} parent=5 // pred_fallthru
        _
      %p207 = scmp.lt.s32.totalorder %s16, 2
      // Predicated region
      $region25: #{vector_quantizer_forward.1} parent=5 // pred_check
        %p208 = pneg %p207
      $region26: #{vector_quantizer_forward.1} parent=5 // pred_check_branch
        %210 = sbr.rel (%p208) target = $region28
      $region27: #{vector_quantizer_forward.1} parent=5 // pred_region
        // Predicated region
        $region29: #{vector_quantizer_forward.1} parent=27 // pred_check
          %p211 = pneg %p36
        $region30: #{vector_quantizer_forward.1} parent=27 // pred_check_branch
          %213 = sbr.rel (%p211) target = $region32
        $region31: #{vector_quantizer_forward.1} parent=27 // pred_region
          %s214 = smul.u32 16, %s16
          %p215 = scmp.lt.s32.totalorder %s214, 31
          %s216 = scalar_select %p215, %s214, 31
          %s217 = smul.addr %s216, 8
          %s218 = scalar_lea.vmem %s0, %s217
          %s219 = smul.u32 16, %s16
        $region32: #{vector_quantizer_forward.1} parent=27 // pred_fallthru
          _
      $region28: #{vector_quantizer_forward.1} parent=5 // pred_fallthru
        _
      %p220 = scmp.le.s32.totalorder 1, %s16
      %p221 = scmp.lt.s32.totalorder %s16, 3
      %p222 = pnand %p220, %p221
      %p223 = pneg %p222
      // Predicated region
      $region33: #{vector_quantizer_forward.1} parent=5 // pred_check
        _
      $region34: #{vector_quantizer_forward.1} parent=5 // pred_check_branch
        %225 = sbr.rel (%p222) target = $region36
      $region35: #{vector_quantizer_forward.1} parent=5 // pred_region
        %s226 = ssub.s32 %s16, 1
        %s227 = smul.u32 16, %s21
        %p228 = scmp.lt.s32.totalorder %s227, 31
        %s229 = scalar_select %p228, %s227, 31
        %s230 = smul.addr %s229, 8
        %s231 = scalar_lea.vmem %s0, %s230
        %p232 = pneg %p42
        %p233 = pneg %p39
        %p234 = pneg %p63
        %p235 = pneg %p60
        %p236 = pneg %p84
        %p237 = pneg %p81
        %p238 = pneg %p105
        %p239 = pneg %p102
        %p240 = pneg %p131
        %p241 = pneg %p128
        %s242 = sand.u32 %s118, 1
        %s243 = scalar_lea.sflag [#allocation3], %s242
        %s244 = sand.u32 %s118, 1
        %s245 = smul.addr %s244, 128
        %s246 = scalar_lea.vmem [#allocation2], %s245
        %p247 = pneg %p157
        %p248 = pneg %p154
        %s249 = smul.u32 16, %s21
        %p250 = scmp.lt.s32.totalorder %s249, 31
        %s251 = scalar_select %p250, %s249, 31
        %s252 = smul.addr %s251, 8
        %s253 = scalar_lea.vmem %s5, %s252
        %p254 = pneg %p183
        %p255 = pneg %p180
        %s256 = smul.u32 16, %s21
        %p257 = scmp.lt.s32.totalorder %s256, 31
        %s258 = scalar_select %p257, %s256, 31
        %s259 = smul.addr %s258, 8
        %s260 = scalar_lea.vmem %s6, %s259
        %s261 = smul.u32 16, %s21
        %p262 = scmp.lt.s32.totalorder %s261, 31
        %s263 = scalar_select %p262, %s261, 31
        %s264 = smul.addr %s263, 8
        %s265 = scalar_lea.vmem %s0, %s264
        %s266 = smul.u32 16, %s21
        %s267 = smul.u32 16, %s21
        %s268 = smul.u32 16, %s21
        %p269 = scmp.lt.s32.totalorder %s268, 31
        %s270 = scalar_select %p269, %s268, 31
        %s271 = smul.addr %s270, 8
        %s272 = scalar_lea.vmem %s5, %s271
        %s273 = smul.u32 16, %s21
        %s274 = smul.u32 16, %s21
        %p275 = scmp.lt.s32.totalorder %s274, 31
        %s276 = scalar_select %p275, %s274, 31
        %s277 = smul.addr %s276, 8
        %s278 = scalar_lea.vmem %s6, %s277
        %s279 = smul.u32 16, %s21
        %v280 = vld [vmem:[%s265] sm:$0xff]
        %v281 = vld [vmem:[%s265 + $0x8] sm:$0xff]
        %v282 = vld [vmem:[%s265 + $0x10] sm:$0xff]
        %v283 = vld [vmem:[%s265 + $0x18] sm:$0xff]
        %v284 = vld [vmem:[%s265 + $0x20] sm:$0xff]
        %v285 = vld [vmem:[%s265 + $0x28] sm:$0xff]
        %v286 = vld [vmem:[%s265 + $0x30] sm:$0xff]
        %v287 = vld [vmem:[%s265 + $0x38] sm:$0xff]
        %v288 = vld [vmem:[%s265 + $0x40] sm:$0xff]
        %v289 = vld [vmem:[%s265 + $0x48] sm:$0xff]
        %v290 = vld [vmem:[%s265 + $0x50] sm:$0xff]
        %v291 = vld [vmem:[%s265 + $0x58] sm:$0xff]
        %v292 = vld [vmem:[%s265 + $0x60] sm:$0xff]
        %v293 = vld [vmem:[%s265 + $0x68] sm:$0xff]
        %v294 = vld [vmem:[%s265 + $0x70] sm:$0xff]
        %v295 = vld [vmem:[%s265 + $0x78] sm:$0xff]
        %v296 = vmul.f32 %v280, %v280
        %v297 = vmul.f32 %v281, %v281
        %v298 = vmul.f32 %v282, %v282
        %v299 = vmul.f32 %v283, %v283
        %v300 = vmul.f32 %v284, %v284
        %v301 = vmul.f32 %v285, %v285
        %v302 = vmul.f32 %v286, %v286
        %v303 = vmul.f32 %v287, %v287
        %v304 = vmul.f32 %v288, %v288
        %v305 = vmul.f32 %v289, %v289
        %v306 = vmul.f32 %v290, %v290
        %v307 = vmul.f32 %v291, %v291
        %v308 = vmul.f32 %v292, %v292
        %v309 = vmul.f32 %v293, %v293
        %v310 = vmul.f32 %v294, %v294
        %v311 = vmul.f32 %v295, %v295
        %vm312 = vcmask 261120
        %v313 = vsel %vm312, %v296, 0.0
        %314 = vadd.xlane.f32.xlu0 %v313
        %v315 = vpop.xlane.xlu0 %314
        %v316 = vsel %vm312, %v297, 0.0
        %317 = vadd.xlane.f32.xlu0 %v316
        %v318 = vpop.xlane.xlu0 %317
        %v319 = vsel %vm312, %v298, 0.0
        %320 = vadd.xlane.f32.xlu0 %v319
        %v321 = vpop.xlane.xlu0 %320
        %v322 = vsel %vm312, %v299, 0.0
        %323 = vadd.xlane.f32.xlu0 %v322
        %v324 = vpop.xlane.xlu0 %323
        %v325 = vsel %vm312, %v300, 0.0
        %326 = vadd.xlane.f32.xlu0 %v325
        %v327 = vpop.xlane.xlu0 %326
        %v328 = vsel %vm312, %v301, 0.0
        %329 = vadd.xlane.f32.xlu0 %v328
        %v330 = vpop.xlane.xlu0 %329
        %v331 = vsel %vm312, %v302, 0.0
        %332 = vadd.xlane.f32.xlu0 %v331
        %v333 = vpop.xlane.xlu0 %332
        %v334 = vsel %vm312, %v303, 0.0
        %335 = vadd.xlane.f32.xlu0 %v334
        %v336 = vpop.xlane.xlu0 %335
        %v337 = vsel %vm312, %v304, 0.0
        %338 = vadd.xlane.f32.xlu0 %v337
        %v339 = vpop.xlane.xlu0 %338
        %v340 = vsel %vm312, %v305, 0.0
        %341 = vadd.xlane.f32.xlu0 %v340
        %v342 = vpop.xlane.xlu0 %341
        %v343 = vsel %vm312, %v306, 0.0
        %344 = vadd.xlane.f32.xlu0 %v343
        %v345 = vpop.xlane.xlu0 %344
        %v346 = vsel %vm312, %v307, 0.0
        %347 = vadd.xlane.f32.xlu0 %v346
        %v348 = vpop.xlane.xlu0 %347
        %v349 = vsel %vm312, %v308, 0.0
        %350 = vadd.xlane.f32.xlu0 %v349
        %v351 = vpop.xlane.xlu0 %350
        %v352 = vsel %vm312, %v309, 0.0
        %353 = vadd.xlane.f32.xlu0 %v352
        %v354 = vpop.xlane.xlu0 %353
        %v355 = vsel %vm312, %v310, 0.0
        %356 = vadd.xlane.f32.xlu0 %v355
        %v357 = vpop.xlane.xlu0 %356
        %v358 = vsel %vm312, %v311, 0.0
        %359 = vadd.xlane.f32.xlu0 %v358
        %v360 = vpop.xlane.xlu0 %359
        %v361 = vld [vmem:[%s2] sm:$0xff]
        %v362 = vld [vmem:[%s2 + $0x8] sm:$0xff]
        %v363 = vld [vmem:[%s2 + $0x10] sm:$0xff]
        %v364 = vld [vmem:[%s2 + $0x18] sm:$0xff]
        %v366 = vsel %vm312, %v280, 0
        %v369 = vsel %vm312, %v281, 0
        %v372 = vsel %vm312, %v282, 0
        %v375 = vsel %vm312, %v283, 0
        %v378 = vsel %vm312, %v284, 0
        %v381 = vsel %vm312, %v285, 0
        %v384 = vsel %vm312, %v286, 0
        %v387 = vsel %vm312, %v287, 0
        %v390 = vsel %vm312, %v288, 0
        %v393 = vsel %vm312, %v289, 0
        %v396 = vsel %vm312, %v290, 0
        %v399 = vsel %vm312, %v291, 0
        %v402 = vsel %vm312, %v292, 0
        %v405 = vsel %vm312, %v293, 0
        %v408 = vsel %vm312, %v294, 0
        %v411 = vsel %vm312, %v295, 0
        %413 = vmatprep.subr.mxu0 0.0
        %414 = vmatpush1.msra.mxu0 0.0
        %415 = vmatprep.subr.mxu0 0.0
        %416 = vmatpush1.msra.mxu0 0.0
        %417 = vmatprep.subr.mxu0 0.0
        %418 = vmatpush1.msra.mxu0 0.0
        %419 = vmatprep.subr.mxu0 0.0
        %420 = vmatpush1.msra.mxu0 0.0
        %421 = vmatprep.subr.mxu0 0.0
        %422 = vmatpush1.msra.mxu0 0.0
        %423 = vmatprep.subr.mxu0 0.0
        %424 = vmatpush1.msra.mxu0 0.0
        %425 = vmatprep.subr.mxu0 0.0
        %426 = vmatpush1.msra.mxu0 0.0
        %427 = vmatprep.subr.mxu0 0.0
        %428 = vmatpush1.msra.mxu0 0.0
        %429 = vmatprep.subr.mxu0 0.0
        %430 = vmatpush1.msra.mxu0 0.0
        %431 = vmatprep.subr.mxu0 0.0
        %432 = vmatpush1.msra.mxu0 0.0
        %433 = vmatprep.subr.mxu0 0.0
        %434 = vmatpush1.msra.mxu0 0.0
        %435 = vmatprep.subr.mxu0 0.0
        %436 = vmatpush1.msra.mxu0 0.0
        %437 = vmatprep.subr.mxu0 0.0
        %438 = vmatpush1.msra.mxu0 %v364
        %439 = vmatprep.subr.mxu0 0.0
        %440 = vmatpush1.msra.mxu0 %v363
        %441 = vmatprep.subr.mxu0 0.0
        %442 = vmatpush1.msra.mxu0 %v362
        %443 = vmatprep.subr.mxu0 0.0
        %444 = vmatpush1.msra.mxu0 %v361
        %445 = vmatprep.subr.mxu0 0.0
        %446 = vmatpush2.msra.mxu0 0.0
        %447 = vmatprep.subr.mxu0 0.0
        %448 = vmatpush2.msra.mxu0 0.0
        %449 = vmatprep.subr.mxu0 0.0
        %450 = vmatpush2.msra.mxu0 0.0
        %451 = vmatprep.subr.mxu0 0.0
        %452 = vmatpush2.msra.mxu0 0.0
        %453 = vmatprep.subr.mxu0 0.0
        %454 = vmatpush2.msra.mxu0 0.0
        %455 = vmatprep.subr.mxu0 0.0
        %456 = vmatpush2.msra.mxu0 0.0
        %457 = vmatprep.subr.mxu0 0.0
        %458 = vmatpush2.msra.mxu0 0.0
        %459 = vmatprep.subr.mxu0 0.0
        %460 = vmatpush2.msra.mxu0 0.0
        %461 = vmatprep.subr.mxu0 0.0
        %462 = vmatpush2.msra.mxu0 0.0
        %463 = vmatprep.subr.mxu0 0.0
        %464 = vmatpush2.msra.mxu0 0.0
        %465 = vmatprep.subr.mxu0 0.0
        %466 = vmatpush2.msra.mxu0 0.0
        %467 = vmatprep.subr.mxu0 0.0
        %468 = vmatpush2.msra.mxu0 0.0
        %469 = vmatprep.subr.mxu0 0.0
        %470 = vmatpush2.msra.mxu0 0.0
        %471 = vmatprep.subr.mxu0 0.0
        %472 = vmatpush2.msra.mxu0 0.0
        %473 = vmatprep.subr.mxu0 0.0
        %474 = vmatpush2.msra.mxu0 0.0
        %475 = vmatprep.subr.mxu0 0.0
        %476 = vmatpush2.msra.mxu0 0.0
        %477 = vmatprep.mubr.f32.mxu0 0.0
        %478 = vmatmul.mubr.f32.gmra.mxu0 %v366
        %v479 = vpop.f32.mrf.mxu0
        %v480 = vadd.f32 0.0, %v479
        %v481 = vpop.f32.mrf.mxu0
        %482 = vmatprep.mubr.f32.mxu0 0.0
        %483 = vmatmul.mubr.f32.gmra.mxu0 %v369
        %v484 = vpop.f32.mrf.mxu0
        %v485 = vadd.f32 0.0, %v484
        %v486 = vpop.f32.mrf.mxu0
        %487 = vmatprep.mubr.f32.mxu0 0.0
        %488 = vmatmul.mubr.f32.gmra.mxu0 %v372
        %v489 = vpop.f32.mrf.mxu0
        %v490 = vadd.f32 0.0, %v489
        %v491 = vpop.f32.mrf.mxu0
        %492 = vmatprep.mubr.f32.mxu0 0.0
        %493 = vmatmul.mubr.f32.gmra.mxu0 %v375
        %v494 = vpop.f32.mrf.mxu0
        %v495 = vadd.f32 0.0, %v494
        %v496 = vpop.f32.mrf.mxu0
        %497 = vmatprep.mubr.f32.mxu0 0.0
        %498 = vmatmul.mubr.f32.gmra.mxu0 %v378
        %v499 = vpop.f32.mrf.mxu0
        %v500 = vadd.f32 0.0, %v499
        %v501 = vpop.f32.mrf.mxu0
        %502 = vmatprep.mubr.f32.mxu0 0.0
        %503 = vmatmul.mubr.f32.gmra.mxu0 %v381
        %v504 = vpop.f32.mrf.mxu0
        %v505 = vadd.f32 0.0, %v504
        %v506 = vpop.f32.mrf.mxu0
        %507 = vmatprep.mubr.f32.mxu0 0.0
        %508 = vmatmul.mubr.f32.gmra.mxu0 %v384
        %v509 = vpop.f32.mrf.mxu0
        %v510 = vadd.f32 0.0, %v509
        %v511 = vpop.f32.mrf.mxu0
        %512 = vmatprep.mubr.f32.mxu0 0.0
        %513 = vmatmul.mubr.f32.gmra.mxu0 %v387
        %v514 = vpop.f32.mrf.mxu0
        %v515 = vadd.f32 0.0, %v514
        %v516 = vpop.f32.mrf.mxu0
        %517 = vmatprep.mubr.f32.mxu0 0.0
        %518 = vmatmul.mubr.f32.gmra.mxu0 %v390
        %v519 = vpop.f32.mrf.mxu0
        %v520 = vadd.f32 0.0, %v519
        %v521 = vpop.f32.mrf.mxu0
        %522 = vmatprep.mubr.f32.mxu0 0.0
        %523 = vmatmul.mubr.f32.gmra.mxu0 %v393
        %v524 = vpop.f32.mrf.mxu0
        %v525 = vadd.f32 0.0, %v524
        %v526 = vpop.f32.mrf.mxu0
        %527 = vmatprep.mubr.f32.mxu0 0.0
        %528 = vmatmul.mubr.f32.gmra.mxu0 %v396
        %v529 = vpop.f32.mrf.mxu0
        %v530 = vadd.f32 0.0, %v529
        %v531 = vpop.f32.mrf.mxu0
        %532 = vmatprep.mubr.f32.mxu0 0.0
        %533 = vmatmul.mubr.f32.gmra.mxu0 %v399
        %v534 = vpop.f32.mrf.mxu0
        %v535 = vadd.f32 0.0, %v534
        %v536 = vpop.f32.mrf.mxu0
        %537 = vmatprep.mubr.f32.mxu0 0.0
        %538 = vmatmul.mubr.f32.gmra.mxu0 %v402
        %v539 = vpop.f32.mrf.mxu0
        %v540 = vadd.f32 0.0, %v539
        %v541 = vpop.f32.mrf.mxu0
        %542 = vmatprep.mubr.f32.mxu0 0.0
        %543 = vmatmul.mubr.f32.gmra.mxu0 %v405
        %v544 = vpop.f32.mrf.mxu0
        %v545 = vadd.f32 0.0, %v544
        %v546 = vpop.f32.mrf.mxu0
        %547 = vmatprep.mubr.f32.mxu0 0.0
        %548 = vmatmul.mubr.f32.gmra.mxu0 %v408
        %v549 = vpop.f32.mrf.mxu0
        %v550 = vadd.f32 0.0, %v549
        %v551 = vpop.f32.mrf.mxu0
        %552 = vmatprep.mubr.f32.mxu0 0.0
        %553 = vmatmul.mubr.f32.gmra.mxu0 %v411
        %v554 = vpop.f32.mrf.mxu0
        %v555 = vadd.f32 0.0, %v554
        %v556 = vpop.f32.mrf.mxu0
        %557 = vdwg.mxu0
        %v558 = vld [vmem:[%s1] sm:$0x1]
        %v560 = vlaneseq
        %v561 = vshrl.u32 %v560, 7
        %v562 = vsub.s32 0, %v561
        %v563 = vrot.slane %v558, %v562
        %v565 = vsub.f32 %v563, %v480
        %v566 = vsub.f32 %v563, %v485
        %v567 = vsub.f32 %v563, %v490
        %v568 = vsub.f32 %v563, %v495
        %v569 = vsub.f32 %v563, %v500
        %v570 = vsub.f32 %v563, %v505
        %v571 = vsub.f32 %v563, %v510
        %v572 = vsub.f32 %v563, %v515
        %v573 = vsub.f32 %v563, %v520
        %v574 = vsub.f32 %v563, %v525
        %v575 = vsub.f32 %v563, %v530
        %v576 = vsub.f32 %v563, %v535
        %v577 = vsub.f32 %v563, %v540
        %v578 = vsub.f32 %v563, %v545
        %v579 = vsub.f32 %v563, %v550
        %v580 = vsub.f32 %v563, %v555
        %581 = vmin.index.xlane.f32.xlu0 %v565
        %v582 = vpop.xlane.xlu0 %581
        %583 = vmin.index.xlane.f32.xlu0 %v566
        %v584 = vpop.xlane.xlu0 %583
        %585 = vmin.index.xlane.f32.xlu0 %v567
        %v586 = vpop.xlane.xlu0 %585
        %587 = vmin.index.xlane.f32.xlu0 %v568
        %v588 = vpop.xlane.xlu0 %587
        %589 = vmin.index.xlane.f32.xlu0 %v569
        %v590 = vpop.xlane.xlu0 %589
        %591 = vmin.index.xlane.f32.xlu0 %v570
        %v592 = vpop.xlane.xlu0 %591
        %593 = vmin.index.xlane.f32.xlu0 %v571
        %v594 = vpop.xlane.xlu0 %593
        %595 = vmin.index.xlane.f32.xlu0 %v572
        %v596 = vpop.xlane.xlu0 %595
        %597 = vmin.index.xlane.f32.xlu0 %v573
        %v598 = vpop.xlane.xlu0 %597
        %599 = vmin.index.xlane.f32.xlu0 %v574
        %v600 = vpop.xlane.xlu0 %599
        %601 = vmin.index.xlane.f32.xlu0 %v575
        %v602 = vpop.xlane.xlu0 %601
        %603 = vmin.index.xlane.f32.xlu0 %v576
        %v604 = vpop.xlane.xlu0 %603
        %605 = vmin.index.xlane.f32.xlu0 %v577
        %v606 = vpop.xlane.xlu0 %605
        %607 = vmin.index.xlane.f32.xlu0 %v578
        %v608 = vpop.xlane.xlu0 %607
        %609 = vmin.index.xlane.f32.xlu0 %v579
        %v610 = vpop.xlane.xlu0 %609
        %611 = vmin.index.xlane.f32.xlu0 %v580
        %v612 = vpop.xlane.xlu0 %611
        %613 = vmin.xlane.f32.xlu0 %v565
        %v614 = vpop.xlane.xlu0 %613
        %615 = vmin.xlane.f32.xlu0 %v566
        %v616 = vpop.xlane.xlu0 %615
        %617 = vmin.xlane.f32.xlu0 %v567
        %v618 = vpop.xlane.xlu0 %617
        %619 = vmin.xlane.f32.xlu0 %v568
        %v620 = vpop.xlane.xlu0 %619
        %621 = vmin.xlane.f32.xlu0 %v569
        %v622 = vpop.xlane.xlu0 %621
        %623 = vmin.xlane.f32.xlu0 %v570
        %v624 = vpop.xlane.xlu0 %623
        %625 = vmin.xlane.f32.xlu0 %v571
        %v626 = vpop.xlane.xlu0 %625
        %627 = vmin.xlane.f32.xlu0 %v572
        %v628 = vpop.xlane.xlu0 %627
        %629 = vmin.xlane.f32.xlu0 %v573
        %v630 = vpop.xlane.xlu0 %629
        %631 = vmin.xlane.f32.xlu0 %v574
        %v632 = vpop.xlane.xlu0 %631
        %633 = vmin.xlane.f32.xlu0 %v575
        %v634 = vpop.xlane.xlu0 %633
        %635 = vmin.xlane.f32.xlu0 %v576
        %v636 = vpop.xlane.xlu0 %635
        %637 = vmin.xlane.f32.xlu0 %v577
        %v638 = vpop.xlane.xlu0 %637
        %639 = vmin.xlane.f32.xlu0 %v578
        %v640 = vpop.xlane.xlu0 %639
        %641 = vmin.xlane.f32.xlu0 %v579
        %v642 = vpop.xlane.xlu0 %641
        %643 = vmin.xlane.f32.xlu0 %v580
        %v644 = vpop.xlane.xlu0 %643
        %v645 = vlaneseq
        %v646 = vand.u32 %v645, 127
        %vm647 = vcmp.eq.s32.totalorder %v646, %v582
        %vm648 = vcmp.eq.s32.totalorder %v646, %v584
        %vm649 = vcmp.eq.s32.totalorder %v646, %v586
        %vm650 = vcmp.eq.s32.totalorder %v646, %v588
        %vm651 = vcmp.eq.s32.totalorder %v646, %v590
        %vm652 = vcmp.eq.s32.totalorder %v646, %v592
        %vm653 = vcmp.eq.s32.totalorder %v646, %v594
        %vm654 = vcmp.eq.s32.totalorder %v646, %v596
        %vm655 = vcmp.eq.s32.totalorder %v646, %v598
        %vm656 = vcmp.eq.s32.totalorder %v646, %v600
        %vm657 = vcmp.eq.s32.totalorder %v646, %v602
        %vm658 = vcmp.eq.s32.totalorder %v646, %v604
        %vm659 = vcmp.eq.s32.totalorder %v646, %v606
        %vm660 = vcmp.eq.s32.totalorder %v646, %v608
        %vm661 = vcmp.eq.s32.totalorder %v646, %v610
        %vm662 = vcmp.eq.s32.totalorder %v646, %v612
        %v663 = vsel %vm647, 1, 0
        %v664 = vsel %vm648, 1, 0
        %v665 = vsel %vm649, 1, 0
        %v666 = vsel %vm650, 1, 0
        %v667 = vsel %vm651, 1, 0
        %v668 = vsel %vm652, 1, 0
        %v669 = vsel %vm653, 1, 0
        %v670 = vsel %vm654, 1, 0
        %v671 = vsel %vm655, 1, 0
        %v672 = vsel %vm656, 1, 0
        %v673 = vsel %vm657, 1, 0
        %v674 = vsel %vm658, 1, 0
        %v675 = vsel %vm659, 1, 0
        %v676 = vsel %vm660, 1, 0
        %v677 = vsel %vm661, 1, 0
        %v678 = vsel %vm662, 1, 0
        %v679 = vcvt.s32.f32 %v663
        %v680 = vcvt.s32.f32 %v664
        %v681 = vcvt.s32.f32 %v665
        %v682 = vcvt.s32.f32 %v666
        %v683 = vcvt.s32.f32 %v667
        %v684 = vcvt.s32.f32 %v668
        %v685 = vcvt.s32.f32 %v669
        %v686 = vcvt.s32.f32 %v670
        %v687 = vcvt.s32.f32 %v671
        %v688 = vcvt.s32.f32 %v672
        %v689 = vcvt.s32.f32 %v673
        %v690 = vcvt.s32.f32 %v674
        %v691 = vcvt.s32.f32 %v675
        %v692 = vcvt.s32.f32 %v676
        %v693 = vcvt.s32.f32 %v677
        %v694 = vcvt.s32.f32 %v678
        %v695 = vld [vmem:[%s3] sm:$0xff]
        %v696 = vld [vmem:[%s3 + $0x8] sm:$0xff]
        %v697 = vld [vmem:[%s3 + $0x10] sm:$0xff]
        %v698 = vld [vmem:[%s3 + $0x18] sm:$0xff]
        %v699 = vld [vmem:[%s3 + $0x20] sm:$0xff]
        %v700 = vld [vmem:[%s3 + $0x28] sm:$0xff]
        %v701 = vld [vmem:[%s3 + $0x30] sm:$0xff]
        %v702 = vld [vmem:[%s3 + $0x38] sm:$0xff]
        %v703 = vld [vmem:[%s3 + $0x40] sm:$0xff]
        %v704 = vld [vmem:[%s3 + $0x48] sm:$0xff]
        %v705 = vld [vmem:[%s3 + $0x50] sm:$0xff]
        %v706 = vld [vmem:[%s3 + $0x58] sm:$0xff]
        %v707 = vld [vmem:[%s3 + $0x60] sm:$0xff]
        %v708 = vld [vmem:[%s3 + $0x68] sm:$0xff]
        %v709 = vld [vmem:[%s3 + $0x70] sm:$0xff]
        %v710 = vld [vmem:[%s3 + $0x78] sm:$0xff]
        %711 = vmatprep.subr.mxu0 0.0
        %712 = vmatpush1.msra.mxu0 %v710
        %713 = vmatprep.subr.mxu0 0.0
        %714 = vmatpush1.msra.mxu0 %v709
        %715 = vmatprep.subr.mxu0 0.0
        %716 = vmatpush1.msra.mxu0 %v708
        %717 = vmatprep.subr.mxu0 0.0
        %718 = vmatpush1.msra.mxu0 %v707
        %719 = vmatprep.subr.mxu0 0.0
        %720 = vmatpush1.msra.mxu0 %v706
        %721 = vmatprep.subr.mxu0 0.0
        %722 = vmatpush1.msra.mxu0 %v705
        %723 = vmatprep.subr.mxu0 0.0
        %724 = vmatpush1.msra.mxu0 %v704
        %725 = vmatprep.subr.mxu0 0.0
        %726 = vmatpush1.msra.mxu0 %v703
        %727 = vmatprep.subr.mxu0 0.0
        %728 = vmatpush1.msra.mxu0 %v702
        %729 = vmatprep.subr.mxu0 0.0
        %730 = vmatpush1.msra.mxu0 %v701
        %731 = vmatprep.subr.mxu0 0.0
        %732 = vmatpush1.msra.mxu0 %v700
        %733 = vmatprep.subr.mxu0 0.0
        %734 = vmatpush1.msra.mxu0 %v699
        %735 = vmatprep.subr.mxu0 0.0
        %736 = vmatpush1.msra.mxu0 %v698
        %737 = vmatprep.subr.mxu0 0.0
        %738 = vmatpush1.msra.mxu0 %v697
        %739 = vmatprep.subr.mxu0 0.0
        %740 = vmatpush1.msra.mxu0 %v696
        %741 = vmatprep.subr.mxu0 0.0
        %742 = vmatpush1.msra.mxu0 %v695
        %743 = vmatprep.subr.mxu0 0.0
        %744 = vmatpush2.msra.mxu0 0.0
        %745 = vmatprep.subr.mxu0 0.0
        %746 = vmatpush2.msra.mxu0 0.0
        %747 = vmatprep.subr.mxu0 0.0
        %748 = vmatpush2.msra.mxu0 0.0
        %749 = vmatprep.subr.mxu0 0.0
        %750 = vmatpush2.msra.mxu0 0.0
        %751 = vmatprep.subr.mxu0 0.0
        %752 = vmatpush2.msra.mxu0 0.0
        %753 = vmatprep.subr.mxu0 0.0
        %754 = vmatpush2.msra.mxu0 0.0
        %755 = vmatprep.subr.mxu0 0.0
        %756 = vmatpush2.msra.mxu0 0.0
        %757 = vmatprep.subr.mxu0 0.0
        %758 = vmatpush2.msra.mxu0 0.0
        %759 = vmatprep.subr.mxu0 0.0
        %760 = vmatpush2.msra.mxu0 0.0
        %761 = vmatprep.subr.mxu0 0.0
        %762 = vmatpush2.msra.mxu0 0.0
        %763 = vmatprep.subr.mxu0 0.0
        %764 = vmatpush2.msra.mxu0 0.0
        %765 = vmatprep.subr.mxu0 0.0
        %766 = vmatpush2.msra.mxu0 0.0
        %767 = vmatprep.subr.mxu0 0.0
        %768 = vmatpush2.msra.mxu0 0.0
        %769 = vmatprep.subr.mxu0 0.0
        %770 = vmatpush2.msra.mxu0 0.0
        %771 = vmatprep.subr.mxu0 0.0
        %772 = vmatpush2.msra.mxu0 0.0
        %773 = vmatprep.subr.mxu0 0.0
        %774 = vmatpush2.msra.mxu0 0.0
        %775 = vmatprep.mubr.f32.mxu0 0.0
        %776 = vmatmul.mubr.f32.gmra.mxu0 %v679
        %v777 = vpop.f32.mrf.mxu0
        %v778 = vadd.f32 0.0, %v777
        %v779 = vpop.f32.mrf.mxu0
        %780 = vmatprep.mubr.f32.mxu0 0.0
        %781 = vmatmul.mubr.f32.gmra.mxu0 %v680
        %v782 = vpop.f32.mrf.mxu0
        %v783 = vadd.f32 0.0, %v782
        %v784 = vpop.f32.mrf.mxu0
        %785 = vmatprep.mubr.f32.mxu0 0.0
        %786 = vmatmul.mubr.f32.gmra.mxu0 %v681
        %v787 = vpop.f32.mrf.mxu0
        %v788 = vadd.f32 0.0, %v787
        %v789 = vpop.f32.mrf.mxu0
        %790 = vmatprep.mubr.f32.mxu0 0.0
        %791 = vmatmul.mubr.f32.gmra.mxu0 %v682
        %v792 = vpop.f32.mrf.mxu0
        %v793 = vadd.f32 0.0, %v792
        %v794 = vpop.f32.mrf.mxu0
        %795 = vmatprep.mubr.f32.mxu0 0.0
        %796 = vmatmul.mubr.f32.gmra.mxu0 %v683
        %v797 = vpop.f32.mrf.mxu0
        %v798 = vadd.f32 0.0, %v797
        %v799 = vpop.f32.mrf.mxu0
        %800 = vmatprep.mubr.f32.mxu0 0.0
        %801 = vmatmul.mubr.f32.gmra.mxu0 %v684
        %v802 = vpop.f32.mrf.mxu0
        %v803 = vadd.f32 0.0, %v802
        %v804 = vpop.f32.mrf.mxu0
        %805 = vmatprep.mubr.f32.mxu0 0.0
        %806 = vmatmul.mubr.f32.gmra.mxu0 %v685
        %v807 = vpop.f32.mrf.mxu0
        %v808 = vadd.f32 0.0, %v807
        %v809 = vpop.f32.mrf.mxu0
        %810 = vmatprep.mubr.f32.mxu0 0.0
        %811 = vmatmul.mubr.f32.gmra.mxu0 %v686
        %v812 = vpop.f32.mrf.mxu0
        %v813 = vadd.f32 0.0, %v812
        %v814 = vpop.f32.mrf.mxu0
        %815 = vmatprep.mubr.f32.mxu0 0.0
        %816 = vmatmul.mubr.f32.gmra.mxu0 %v687
        %v817 = vpop.f32.mrf.mxu0
        %v818 = vadd.f32 0.0, %v817
        %v819 = vpop.f32.mrf.mxu0
        %820 = vmatprep.mubr.f32.mxu0 0.0
        %821 = vmatmul.mubr.f32.gmra.mxu0 %v688
        %v822 = vpop.f32.mrf.mxu0
        %v823 = vadd.f32 0.0, %v822
        %v824 = vpop.f32.mrf.mxu0
        %825 = vmatprep.mubr.f32.mxu0 0.0
        %826 = vmatmul.mubr.f32.gmra.mxu0 %v689
        %v827 = vpop.f32.mrf.mxu0
        %v828 = vadd.f32 0.0, %v827
        %v829 = vpop.f32.mrf.mxu0
        %830 = vmatprep.mubr.f32.mxu0 0.0
        %831 = vmatmul.mubr.f32.gmra.mxu0 %v690
        %v832 = vpop.f32.mrf.mxu0
        %v833 = vadd.f32 0.0, %v832
        %v834 = vpop.f32.mrf.mxu0
        %835 = vmatprep.mubr.f32.mxu0 0.0
        %836 = vmatmul.mubr.f32.gmra.mxu0 %v691
        %v837 = vpop.f32.mrf.mxu0
        %v838 = vadd.f32 0.0, %v837
        %v839 = vpop.f32.mrf.mxu0
        %840 = vmatprep.mubr.f32.mxu0 0.0
        %841 = vmatmul.mubr.f32.gmra.mxu0 %v692
        %v842 = vpop.f32.mrf.mxu0
        %v843 = vadd.f32 0.0, %v842
        %v844 = vpop.f32.mrf.mxu0
        %845 = vmatprep.mubr.f32.mxu0 0.0
        %846 = vmatmul.mubr.f32.gmra.mxu0 %v693
        %v847 = vpop.f32.mrf.mxu0
        %v848 = vadd.f32 0.0, %v847
        %v849 = vpop.f32.mrf.mxu0
        %850 = vmatprep.mubr.f32.mxu0 0.0
        %851 = vmatmul.mubr.f32.gmra.mxu0 %v694
        %v852 = vpop.f32.mrf.mxu0
        %v853 = vadd.f32 0.0, %v852
        %v854 = vpop.f32.mrf.mxu0
        %855 = vdwg.mxu0
        %856 = vst.msk [vmem:[%s246] sm:$0xff] %vm312, %v778
        %857 = vst.msk [vmem:[%s246 + $0x8] sm:$0xff] %vm312, %v783
        %858 = vst.msk [vmem:[%s246 + $0x10] sm:$0xff] %vm312, %v788
        %859 = vst.msk [vmem:[%s246 + $0x18] sm:$0xff] %vm312, %v793
        %860 = vst.msk [vmem:[%s246 + $0x20] sm:$0xff] %vm312, %v798
        %861 = vst.msk [vmem:[%s246 + $0x28] sm:$0xff] %vm312, %v803
        %862 = vst.msk [vmem:[%s246 + $0x30] sm:$0xff] %vm312, %v808
        %863 = vst.msk [vmem:[%s246 + $0x38] sm:$0xff] %vm312, %v813
        %864 = vst.msk [vmem:[%s246 + $0x40] sm:$0xff] %vm312, %v818
        %865 = vst.msk [vmem:[%s246 + $0x48] sm:$0xff] %vm312, %v823
        %866 = vst.msk [vmem:[%s246 + $0x50] sm:$0xff] %vm312, %v828
        %867 = vst.msk [vmem:[%s246 + $0x58] sm:$0xff] %vm312, %v833
        %868 = vst.msk [vmem:[%s246 + $0x60] sm:$0xff] %vm312, %v838
        %869 = vst.msk [vmem:[%s246 + $0x68] sm:$0xff] %vm312, %v843
        %870 = vst.msk [vmem:[%s246 + $0x70] sm:$0xff] %vm312, %v848
        %871 = vst.msk [vmem:[%s246 + $0x78] sm:$0xff] %vm312, %v853
        %vm872 = vcmask 7168
        %873 = vst.msk [vmem:[%s272] sm:$0xff] %vm872, %v582
        %874 = vst.msk [vmem:[%s272 + $0x8] sm:$0xff] %vm872, %v584
        %875 = vst.msk [vmem:[%s272 + $0x10] sm:$0xff] %vm872, %v586
        %876 = vst.msk [vmem:[%s272 + $0x18] sm:$0xff] %vm872, %v588
        %877 = vst.msk [vmem:[%s272 + $0x20] sm:$0xff] %vm872, %v590
        %878 = vst.msk [vmem:[%s272 + $0x28] sm:$0xff] %vm872, %v592
        %879 = vst.msk [vmem:[%s272 + $0x30] sm:$0xff] %vm872, %v594
        %880 = vst.msk [vmem:[%s272 + $0x38] sm:$0xff] %vm872, %v596
        %881 = vst.msk [vmem:[%s272 + $0x40] sm:$0xff] %vm872, %v598
        %882 = vst.msk [vmem:[%s272 + $0x48] sm:$0xff] %vm872, %v600
        %883 = vst.msk [vmem:[%s272 + $0x50] sm:$0xff] %vm872, %v602
        %884 = vst.msk [vmem:[%s272 + $0x58] sm:$0xff] %vm872, %v604
        %885 = vst.msk [vmem:[%s272 + $0x60] sm:$0xff] %vm872, %v606
        %886 = vst.msk [vmem:[%s272 + $0x68] sm:$0xff] %vm872, %v608
        %887 = vst.msk [vmem:[%s272 + $0x70] sm:$0xff] %vm872, %v610
        %888 = vst.msk [vmem:[%s272 + $0x78] sm:$0xff] %vm872, %v612
        %v889 = vmul.f32 %v614, 2.0
        %v890 = vmul.f32 %v616, 2.0
        %v891 = vmul.f32 %v618, 2.0
        %v892 = vmul.f32 %v620, 2.0
        %v893 = vmul.f32 %v622, 2.0
        %v894 = vmul.f32 %v624, 2.0
        %v895 = vmul.f32 %v626, 2.0
        %v896 = vmul.f32 %v628, 2.0
        %v897 = vmul.f32 %v630, 2.0
        %v898 = vmul.f32 %v632, 2.0
        %v899 = vmul.f32 %v634, 2.0
        %v900 = vmul.f32 %v636, 2.0
        %v901 = vmul.f32 %v638, 2.0
        %v902 = vmul.f32 %v640, 2.0
        %v903 = vmul.f32 %v642, 2.0
        %v904 = vmul.f32 %v644, 2.0
        %v905 = vadd.f32 %v315, %v889
        %v906 = vadd.f32 %v318, %v890
        %v907 = vadd.f32 %v321, %v891
        %v908 = vadd.f32 %v324, %v892
        %v909 = vadd.f32 %v327, %v893
        %v910 = vadd.f32 %v330, %v894
        %v911 = vadd.f32 %v333, %v895
        %v912 = vadd.f32 %v336, %v896
        %v913 = vadd.f32 %v339, %v897
        %v914 = vadd.f32 %v342, %v898
        %v915 = vadd.f32 %v345, %v899
        %v916 = vadd.f32 %v348, %v900
        %v917 = vadd.f32 %v351, %v901
        %v918 = vadd.f32 %v354, %v902
        %v919 = vadd.f32 %v357, %v903
        %v920 = vadd.f32 %v360, %v904
        %v921 = vmax.f32 %v905, 0.0
        %v922 = vmax.f32 %v906, 0.0
        %v923 = vmax.f32 %v907, 0.0
        %v924 = vmax.f32 %v908, 0.0
        %v925 = vmax.f32 %v909, 0.0
        %v926 = vmax.f32 %v910, 0.0
        %v927 = vmax.f32 %v911, 0.0
        %v928 = vmax.f32 %v912, 0.0
        %v929 = vmax.f32 %v913, 0.0
        %v930 = vmax.f32 %v914, 0.0
        %v931 = vmax.f32 %v915, 0.0
        %v932 = vmax.f32 %v916, 0.0
        %v933 = vmax.f32 %v917, 0.0
        %v934 = vmax.f32 %v918, 0.0
        %v935 = vmax.f32 %v919, 0.0
        %v936 = vmax.f32 %v920, 0.0
        %s937 = smul.u32 %s21, 128
        %v938 = vlaneseq
        %v939 = vshrl.u32 %v938, 7
        %v940 = vadd.s32 %v939, 8
        %v941 = vadd.s32 %v939, 16
        %v942 = vadd.s32 %v939, 24
        %v943 = vadd.s32 %v939, 32
        %v944 = vadd.s32 %v939, 40
        %v945 = vadd.s32 %v939, 48
        %v946 = vadd.s32 %v939, 56
        %v947 = vadd.s32 %v939, 64
        %v948 = vadd.s32 %v939, 72
        %v949 = vadd.s32 %v939, 80
        %v950 = vadd.s32 %v939, 88
        %v951 = vadd.s32 %v939, 96
        %v952 = vadd.s32 %v939, 104
        %v953 = vadd.s32 %v939, 112
        %v954 = vadd.s32 %v939, 120
        %v955 = vstv %s937
        %v956 = vadd.s32 %v955, %v939
        %v957 = vadd.s32 %v955, %v940
        %v958 = vadd.s32 %v955, %v941
        %v959 = vadd.s32 %v955, %v942
        %v960 = vadd.s32 %v955, %v943
        %v961 = vadd.s32 %v955, %v944
        %v962 = vadd.s32 %v955, %v945
        %v963 = vadd.s32 %v955, %v946
        %v964 = vadd.s32 %v955, %v947
        %v965 = vadd.s32 %v955, %v948
        %v966 = vadd.s32 %v955, %v949
        %v967 = vadd.s32 %v955, %v950
        %v968 = vadd.s32 %v955, %v951
        %v969 = vadd.s32 %v955, %v952
        %v970 = vadd.s32 %v955, %v953
        %v971 = vadd.s32 %v955, %v954
        %vm972 = vcmp.lt.s32.totalorder %v956, 256
        %vm973 = vcmp.lt.s32.totalorder %v957, 256
        %vm974 = vcmp.lt.s32.totalorder %v958, 256
        %vm975 = vcmp.lt.s32.totalorder %v959, 256
        %vm976 = vcmp.lt.s32.totalorder %v960, 256
        %vm977 = vcmp.lt.s32.totalorder %v961, 256
        %vm978 = vcmp.lt.s32.totalorder %v962, 256
        %vm979 = vcmp.lt.s32.totalorder %v963, 256
        %vm980 = vcmp.lt.s32.totalorder %v964, 256
        %vm981 = vcmp.lt.s32.totalorder %v965, 256
        %vm982 = vcmp.lt.s32.totalorder %v966, 256
        %vm983 = vcmp.lt.s32.totalorder %v967, 256
        %vm984 = vcmp.lt.s32.totalorder %v968, 256
        %vm985 = vcmp.lt.s32.totalorder %v969, 256
        %vm986 = vcmp.lt.s32.totalorder %v970, 256
        %vm987 = vcmp.lt.s32.totalorder %v971, 256
        %v988 = vsel %vm972, %v921, 0.0
        %v989 = vsel %vm973, %v922, 0.0
        %v990 = vsel %vm974, %v923, 0.0
        %v991 = vsel %vm975, %v924, 0.0
        %v992 = vsel %vm976, %v925, 0.0
        %v993 = vsel %vm977, %v926, 0.0
        %v994 = vsel %vm978, %v927, 0.0
        %v995 = vsel %vm979, %v928, 0.0
        %v996 = vsel %vm980, %v929, 0.0
        %v997 = vsel %vm981, %v930, 0.0
        %v998 = vsel %vm982, %v931, 0.0
        %v999 = vsel %vm983, %v932, 0.0
        %v1000 = vsel %vm984, %v933, 0.0
        %v1001 = vsel %vm985, %v934, 0.0
        %v1002 = vsel %vm986, %v935, 0.0
        %v1003 = vsel %vm987, %v936, 0.0
        %1004 = vst.msk [vmem:[%s278] sm:$0xff] %vm872, %v988
        %1005 = vst.msk [vmem:[%s278 + $0x8] sm:$0xff] %vm872, %v989
        %1006 = vst.msk [vmem:[%s278 + $0x10] sm:$0xff] %vm872, %v990
        %1007 = vst.msk [vmem:[%s278 + $0x18] sm:$0xff] %vm872, %v991
        %1008 = vst.msk [vmem:[%s278 + $0x20] sm:$0xff] %vm872, %v992
        %1009 = vst.msk [vmem:[%s278 + $0x28] sm:$0xff] %vm872, %v993
        %1010 = vst.msk [vmem:[%s278 + $0x30] sm:$0xff] %vm872, %v994
        %1011 = vst.msk [vmem:[%s278 + $0x38] sm:$0xff] %vm872, %v995
        %1012 = vst.msk [vmem:[%s278 + $0x40] sm:$0xff] %vm872, %v996
        %1013 = vst.msk [vmem:[%s278 + $0x48] sm:$0xff] %vm872, %v997
        %1014 = vst.msk [vmem:[%s278 + $0x50] sm:$0xff] %vm872, %v998
        %1015 = vst.msk [vmem:[%s278 + $0x58] sm:$0xff] %vm872, %v999
        %1016 = vst.msk [vmem:[%s278 + $0x60] sm:$0xff] %vm872, %v1000
        %1017 = vst.msk [vmem:[%s278 + $0x68] sm:$0xff] %vm872, %v1001
        %1018 = vst.msk [vmem:[%s278 + $0x70] sm:$0xff] %vm872, %v1002
        %1019 = vst.msk [vmem:[%s278 + $0x78] sm:$0xff] %vm872, %v1003
        %s1020 = sand.u32 %s118, 1
        %s1021 = scalar_lea.sflag [#allocation3], %s1020
        %s1022 = sand.u32 %s118, 1
        %s1023 = smul.addr %s1022, 128
        %s1024 = scalar_lea.vmem [#allocation2], %s1023
        %s1025 = smul.u32 16, %s21
        %p1026 = scmp.lt.s32.totalorder %s1025, 31
        %s1027 = scalar_select %p1026, %s1025, 31
        %s1028 = smul.addr %s1027, 8
        %s1029 = scalar_lea.vmem %s5, %s1028
        %s1030 = smul.u32 16, %s21
        %p1031 = scmp.lt.s32.totalorder %s1030, 31
        %s1032 = scalar_select %p1031, %s1030, 31
        %s1033 = smul.addr %s1032, 8
        %s1034 = scalar_lea.vmem %s6, %s1033
        // Predicated region
        $region37: #{vector_quantizer_forward.1} parent=35 // pred_check
          %p1035 = pneg %p128
        $region38: #{vector_quantizer_forward.1} parent=35 // pred_check_branch
          %1037 = sbr.rel (%p1035) target = $region40
        $region39: #{vector_quantizer_forward.1} parent=35 // pred_region
          %s1038 = smul.u32 16, %s21
          %s1040 = ssub.s32 2048, 2048
          %1041 = vsyncadd %s1021, %s1040
          %s1042 = smul.addr %s1038, 128
          %s1043 = scalar_lea.hbm %s4, %s1042
          %s1044 = sshll.u32 %s1024, 4
          %s1045 = int_to_ptr.vmem [resolvable:$true] %s1044
          %1050 = dma.vmem_to_hbm [thread:$0]  %s1045, 2048, %s1043, %s1021, 128, 128, 8
        $region40: #{vector_quantizer_forward.1} parent=35 // pred_fallthru
          _
        // Predicated region
        $region41: #{vector_quantizer_forward.1} parent=35 // pred_check
          %p1051 = pneg %p154
        $region42: #{vector_quantizer_forward.1} parent=35 // pred_check_branch
          %1053 = sbr.rel (%p1051) target = $region44
        $region43: #{vector_quantizer_forward.1} parent=35 // pred_region
          %s1054 = smul.u32 16, %s21
        $region44: #{vector_quantizer_forward.1} parent=35 // pred_fallthru
          _
        // Predicated region
        $region45: #{vector_quantizer_forward.1} parent=35 // pred_check
          %p1055 = pneg %p180
        $region46: #{vector_quantizer_forward.1} parent=35 // pred_check_branch
          %1057 = sbr.rel (%p1055) target = $region48
        $region47: #{vector_quantizer_forward.1} parent=35 // pred_region
          %s1058 = smul.u32 16, %s21
        $region48: #{vector_quantizer_forward.1} parent=35 // pred_fallthru
          _
      $region36: #{vector_quantizer_forward.1} parent=5 // pred_fallthru
        _
      %p1059 = scmp.le.s32.totalorder 2, %s16
      // Predicated region
      $region49: #{vector_quantizer_forward.1} parent=5 // pred_check
        %p1060 = pneg %p1059
      $region50: #{vector_quantizer_forward.1} parent=5 // pred_check_branch
        %1062 = sbr.rel (%p1060) target = $region52
      $region51: #{vector_quantizer_forward.1} parent=5 // pred_region
        %s1063 = ssub.s32 %s16, 2
        // Predicated region
        $region53: #{vector_quantizer_forward.1} parent=51 // pred_check
          %p1064 = pneg %p134
        $region54: #{vector_quantizer_forward.1} parent=51 // pred_check_branch
          %1066 = sbr.rel (%p1064) target = $region56
        $region55: #{vector_quantizer_forward.1} parent=51 // pred_region
          %s1067 = sand.u32 %s119, 1
          %s1068 = scalar_lea.sflag [#allocation3], %s1067
          %s1069 = sand.u32 %s119, 1
          %s1070 = smul.addr %s1069, 128
          %s1071 = scalar_lea.vmem [#allocation2], %s1070
          %1072 = dma.done %s1068, 2048
        $region56: #{vector_quantizer_forward.1} parent=51 // pred_fallthru
          _
        // Predicated region
        $region57: #{vector_quantizer_forward.1} parent=51 // pred_check
          %p1073 = pneg %p160
        $region58: #{vector_quantizer_forward.1} parent=51 // pred_check_branch
          %1075 = sbr.rel (%p1073) target = $region60
        $region59: #{vector_quantizer_forward.1} parent=51 // pred_region
          %s1076 = smul.u32 16, %s22
          %p1077 = scmp.lt.s32.totalorder %s1076, 31
          %s1078 = scalar_select %p1077, %s1076, 31
          %s1079 = smul.addr %s1078, 8
          %s1080 = scalar_lea.vmem %s5, %s1079
        $region60: #{vector_quantizer_forward.1} parent=51 // pred_fallthru
          _
        // Predicated region
        $region61: #{vector_quantizer_forward.1} parent=51 // pred_check
          %p1081 = pneg %p186
        $region62: #{vector_quantizer_forward.1} parent=51 // pred_check_branch
          %1083 = sbr.rel (%p1081) target = $region64
        $region63: #{vector_quantizer_forward.1} parent=51 // pred_region
          %s1084 = smul.u32 16, %s22
          %p1085 = scmp.lt.s32.totalorder %s1084, 31
          %s1086 = scalar_select %p1085, %s1084, 31
          %s1087 = smul.addr %s1086, 8
          %s1088 = scalar_lea.vmem %s6, %s1087
        $region64: #{vector_quantizer_forward.1} parent=51 // pred_fallthru
          _
      $region52: #{vector_quantizer_forward.1} parent=5 // pred_fallthru
        _
    $region6: #{vector_quantizer_forward.1} parent=1 // loop_footer
      %s20 = sadd.s32 1, %s16
    $region7: #{vector_quantizer_forward.1} parent=1 // loop_footer_branch
      %15 = sbr.rel target = $region3
    $region8: #{vector_quantizer_forward.1} parent=1 // loop_exit
      _
    %1089 = vsyncpa [#allocation3], 1
    %s1090 = scalar_lea.sflag [#allocation3], 1
    %1091 = vsyncpa %s1090, 1

</llo_original>
